<compile_context>
chip_gen: v7x
topology: tpu7x:2x2x1
jax: 0.10.0
libtpu: 0.0.40
codegen_flags: <defaults>
</compile_context>

<pallas_src>
import jax
import jax.numpy as jnp
import numpy as np
from jax.experimental import pallas as pl
from jax.experimental.pallas import tpu as pltpu

DROPOUT_RATE = 0.1  # eval-mode => identity


def _round_up(n, m):
    return ((n + m - 1) // m) * m


# -----------------------------------------------------------------------------
# Kernel: one grid step == one RNN time step.  Hidden state lives in hid_ref
# (VMEM-resident output block with constant index_map).
# -----------------------------------------------------------------------------
def rnn_seq_kernel(x_ref, h0_ref, wx_ref, wh_ref, bin_ref, wo_ref, bo_ref,
                   out_ref, hid_ref):
    Hp = hid_ref.shape[1]          # padded hidden width (static, lane-aligned)

    @pl.when(pl.program_id(0) == 0)
    def _():
        hid_ref[...] = h0_ref[...]                       # load initial hidden once

    x = x_ref[0]                   # (B, I)   current time step
    h = hid_ref[...]               # (B, Hp)  carried pre-ReLU hidden

    # Fused linear1+linear2: z = [hidden_new | postLin]  -> (B, Hp+Op)
    z = (jnp.dot(x, wx_ref[...], preferred_element_type=jnp.float32)
         + jnp.dot(h, wh_ref[...], preferred_element_type=jnp.float32)
         + bin_ref[...])

    hid_ref[...] = z[:, :Hp]       # new hidden state (pre-ReLU), stays in VMEM

    # relu(cat([hidden, postLin])) ; dropout = identity (eval mode)
    r = jnp.maximum(z, 0.0)

    # outLinear on the already-concatenated slab -> (B, Op), lane-dense store
    out_ref[0] = (jnp.dot(r, wo_ref[...], preferred_element_type=jnp.float32)
                  + bo_ref[...])


# -----------------------------------------------------------------------------
# Wrapper: pad/fuse parameters, run the sequence kernel, slice padding away.
# -----------------------------------------------------------------------------
def _pack_params(params, I, H, O):
    """Fuse (linear1, linear2) into one lane-padded input-stage weight and pad
    outLinear to a lane-dense output width.  Zero padding keeps math exact."""
    Hp = _round_up(H, 128)
    Op = _round_up(O, 128)
    HOp = Hp + Op

    w1, b1 = params["w1"], params["b1"]   # (I+H, O), (1, O)
    w2, b2 = params["w2"], params["b2"]   # (I+H, H), (1, H)
    wo, bo = params["wo"], params["bo"]   # (H+O, O), (1, O)

    # Fused first-stage weight: columns [0:H] <- linear2, [Hp:Hp+O] <- linear1.
    w_in = jnp.zeros((I + H, HOp), jnp.float32)
    w_in = w_in.at[:, :H].set(w2).at[:, Hp:Hp + O].set(w1)
    wx = w_in[:I]                                                   # (I, HOp)
    wh = jnp.zeros((Hp, HOp), jnp.float32).at[:H].set(w_in[I:])     # (Hp, HOp)

    b_in = jnp.zeros((1, HOp), jnp.float32)
    b_in = b_in.at[:, :H].set(b2).at[:, Hp:Hp + O].set(b1)          # (1, HOp)

    # outLinear weight laid out against the padded [hidden | postLin] slab.
    w_out = jnp.zeros((HOp, Op), jnp.float32)
    w_out = w_out.at[:H, :O].set(wo[:H]).at[Hp:Hp + O, :O].set(wo[H:])
    b_out = jnp.zeros((1, Op), jnp.float32).at[:, :O].set(bo)       # (1, Op)

    return wx, wh, b_in, w_out, b_out, Hp, Op


@jax.jit
def rnn_forward(xs, h0, params):
    """xs: (T, B, I) sequence, h0: (B, H).  Returns (outputs (T, B, O),
    final hidden (B, H)), matching T applications of the PyTorch cell."""
    T, B, I = xs.shape
    H = h0.shape[1]
    O = params["b1"].shape[1]

    wx, wh, b_in, w_out, b_out, Hp, Op = _pack_params(params, I, H, O)
    HOp = Hp + Op

    # Sublane-align the batch; padded rows are zeros and sliced away below.
    Bp = _round_up(B, 8)
    xs_p = jnp.zeros((T, Bp, I), jnp.float32).at[:, :B, :].set(xs)
    h0p = jnp.zeros((Bp, Hp), jnp.float32).at[:B, :H].set(h0)

    outs_p, h_final_p = pl.pallas_call(
        rnn_seq_kernel,
        out_shape=(jax.ShapeDtypeStruct((T, Bp, Op), jnp.float32),
                   jax.ShapeDtypeStruct((Bp, Hp), jnp.float32)),
        grid=(T,),
        in_specs=[
            pl.BlockSpec((1, Bp, I), lambda t: (t, 0, 0)),   # xs  (streamed per step)
            pl.BlockSpec((Bp, Hp), lambda t: (0, 0)),        # h0  (fetched once)
            pl.BlockSpec((I, HOp), lambda t: (0, 0)),        # Wx  (resident)
            pl.BlockSpec((Hp, HOp), lambda t: (0, 0)),       # Wh  (resident)
            pl.BlockSpec((1, HOp), lambda t: (0, 0)),        # b_in
            pl.BlockSpec((HOp, Op), lambda t: (0, 0)),       # W_out
            pl.BlockSpec((1, Op), lambda t: (0, 0)),         # b_out
        ],
        out_specs=(
            pl.BlockSpec((1, Bp, Op), lambda t: (t, 0, 0)),  # per-step outputs
            pl.BlockSpec((Bp, Hp), lambda t: (0, 0)),        # hidden (VMEM-resident)
        ),
        compiler_params=pltpu.CompilerParams(
            dimension_semantics=("arbitrary",)),             # recurrent time axis
        input_output_aliases={1: 1},                         # h0 buffer -> final hidden
    )(xs_p, h0p, wx, wh, b_in, w_out, b_out)

    return outs_p[:, :B, :O], h_final_p[:B, :H]


# -----------------------------------------------------------------------------
# Parameters + pure-JAX reference (mirrors the PyTorch forward, eval mode).
# -----------------------------------------------------------------------------
def init_params(key, input_size, hidden_size, output_size):
    """PyTorch nn.Linear(in, out) stores weight (out, in); we keep the
    transpose so the kernel computes y = x @ W + b."""
    ks = jax.random.split(key, 6)
    scale = 0.05
    return {
        "w1": scale * jax.random.normal(ks[0], (input_size + hidden_size, output_size), jnp.float32),
        "b1": scale * jax.random.normal(ks[1], (1, output_size), jnp.float32),
        "w2": scale * jax.random.normal(ks[2], (input_size + hidden_size, hidden_size), jnp.float32),
        "b2": scale * jax.random.normal(ks[3], (1, hidden_size), jnp.float32),
        "wo": scale * jax.random.normal(ks[4], (hidden_size + output_size, output_size), jnp.float32),
        "bo": scale * jax.random.normal(ks[5], (1, output_size), jnp.float32),
    }


def rnn_cell_reference(x, h, params):
    comb = jnp.concatenate([x, h], axis=1)
    post_lin = comb @ params["w1"] + params["b1"]
    hidden = comb @ params["w2"] + params["b2"]
    combined = jnp.concatenate([hidden, post_lin], axis=1)
    post_relu = jnp.maximum(combined, 0.0)
    out = post_relu @ params["wo"] + params["bo"]   # dropout = identity (eval)
    return out, hidden


def rnn_seq_reference(xs, h0, params):
    h = h0
    outs = []
    for t in range(xs.shape[0]):
        o, h = rnn_cell_reference(xs[t], h, params)
        outs.append(o)
    return jnp.stack(outs, 0), h


if __name__ == "__main__":
    # Small shapes consistent with the module: (T, B, input), (B, hidden)
    T, B, INPUT_SIZE, HIDDEN_SIZE, OUTPUT_SIZE = 16, 8, 16, 32, 1

    key = jax.random.PRNGKey(0)
    kx, kh, kp = jax.random.split(key, 3)
    xs = jax.random.normal(kx, (T, B, INPUT_SIZE), jnp.float32)
    h0 = jax.random.normal(kh, (B, HIDDEN_SIZE), jnp.float32)
    params = init_params(kp, INPUT_SIZE, HIDDEN_SIZE, OUTPUT_SIZE)

    outs, h_final = rnn_forward(xs, h0, params)
    jax.block_until_ready((outs, h_final))

    outs_ref, h_ref = rnn_seq_reference(xs, h0, params)
    assert outs.shape == (T, B, OUTPUT_SIZE) and h_final.shape == (B, HIDDEN_SIZE)
    np.testing.assert_allclose(np.asarray(outs), np.asarray(outs_ref), rtol=1e-4, atol=1e-4)
    np.testing.assert_allclose(np.asarray(h_final), np.asarray(h_ref), rtol=1e-4, atol=1e-4)

    print("KERNEL_OK")
</pallas_src>

<mosaic_0001>
module attributes {stable_mosaic.version = 11 : i64} {
  func.func @rnn_seq_kernel(%arg0: i32, %arg1: memref<1x8x16xf32, #tpu.memory_space<vmem>>, %arg2: memref<8x128xf32, #tpu.memory_space<vmem>>, %arg3: memref<16x256xf32, #tpu.memory_space<vmem>>, %arg4: memref<128x256xf32, #tpu.memory_space<vmem>>, %arg5: memref<1x256xf32, #tpu.memory_space<vmem>>, %arg6: memref<256x128xf32, #tpu.memory_space<vmem>>, %arg7: memref<1x128xf32, #tpu.memory_space<vmem>>, %arg8: memref<1x8x128xf32, #tpu.memory_space<vmem>>, %arg9: memref<8x128xf32, #tpu.memory_space<vmem>>) attributes {dimension_semantics = [#tpu.dimension_semantics<arbitrary>], iteration_bounds = array<i64: 16>, scalar_prefetch = 0 : i64, scratch_operands = 0 : i64, tpu.core_type = #tpu.core_type<tc>, window_params = [{transform_indices = @transform_0, window_bounds = array<i64: 1, 8, 16>}, {pipeline_mode = #tpu.pipeline_mode<synchronous>, transform_indices = @transform_1, window_bounds = array<i64: 8, 128>}, {pipeline_mode = #tpu.pipeline_mode<synchronous>, transform_indices = @transform_2, window_bounds = array<i64: 16, 256>}, {pipeline_mode = #tpu.pipeline_mode<synchronous>, transform_indices = @transform_3, window_bounds = array<i64: 128, 256>}, {pipeline_mode = #tpu.pipeline_mode<synchronous>, transform_indices = @transform_4, window_bounds = array<i64: 1, 256>}, {pipeline_mode = #tpu.pipeline_mode<synchronous>, transform_indices = @transform_5, window_bounds = array<i64: 256, 128>}, {pipeline_mode = #tpu.pipeline_mode<synchronous>, transform_indices = @transform_6, window_bounds = array<i64: 1, 128>}, {transform_indices = @transform_7, window_bounds = array<i64: 1, 8, 128>}, {pipeline_mode = #tpu.pipeline_mode<synchronous>, transform_indices = @transform_8, window_bounds = array<i64: 8, 128>}]} {
    %c0_i32 = arith.constant 0 : i32
    %0 = arith.cmpi eq, %arg0, %c0_i32 : i32
    %1 = arith.extui %0 : i1 to i32
    %c0_i32_0 = arith.constant 0 : i32
    %2 = arith.cmpi ne, %1, %c0_i32_0 : i32
    scf.if %2 {
      %c0_23 = arith.constant 0 : index
      %c0_24 = arith.constant 0 : index
      %26 = vector.load %arg2[%c0_23, %c0_24] : memref<8x128xf32, #tpu.memory_space<vmem>>, vector<8x128xf32>
      %c0_25 = arith.constant 0 : index
      %c0_26 = arith.constant 0 : index
      %27 = vector.load %arg9[%c0_25, %c0_26] : memref<8x128xf32, #tpu.memory_space<vmem>>, vector<8x128xf32>
      tpu.vector_store %arg9[%c0_25, %c0_26], %26 {strides = array<i32>} : memref<8x128xf32, #tpu.memory_space<vmem>>, vector<8x128xf32>,
    } else {
    }
    %c0 = arith.constant 0 : index
    %c0_1 = arith.constant 0 : index
    %c0_2 = arith.constant 0 : index
    %3 = vector.load %arg1[%c0, %c0_1, %c0_2] : memref<1x8x16xf32, #tpu.memory_space<vmem>>, vector<1x8x16xf32>
    %4 = vector.shape_cast %3 : vector<1x8x16xf32> to vector<8x16xf32>
    %c0_3 = arith.constant 0 : index
    %c0_4 = arith.constant 0 : index
    %5 = vector.load %arg9[%c0_3, %c0_4] : memref<8x128xf32, #tpu.memory_space<vmem>>, vector<8x128xf32>
    %c0_5 = arith.constant 0 : index
    %c0_6 = arith.constant 0 : index
    %6 = vector.load %arg3[%c0_5, %c0_6] : memref<16x256xf32, #tpu.memory_space<vmem>>, vector<16x256xf32>
    %cst = arith.constant dense<0.000000e+00> : vector<8x256xf32>
    %7 = tpu.matmul %4, %6, %cst {dimension_numbers = #tpu.dot_dimension_numbers<[1], [0], [0], [1], [0, 0, 1, 1], [], []>} : vector<8x16xf32>, vector<16x256xf32>, vector<8x256xf32> -> vector<8x256xf32>
    %c0_7 = arith.constant 0 : index
    %c0_8 = arith.constant 0 : index
    %8 = vector.load %arg4[%c0_7, %c0_8] : memref<128x256xf32, #tpu.memory_space<vmem>>, vector<128x256xf32>
    %cst_9 = arith.constant dense<0.000000e+00> : vector<8x256xf32>
    %9 = tpu.matmul %5, %8, %cst_9 {dimension_numbers = #tpu.dot_dimension_numbers<[1], [0], [0], [1], [0, 0, 1, 1], [], []>} : vector<8x128xf32>, vector<128x256xf32>, vector<8x256xf32> -> vector<8x256xf32>
    %10 = arith.addf %7, %9 : vector<8x256xf32>
    %c0_10 = arith.constant 0 : index
    %c0_11 = arith.constant 0 : index
    %11 = vector.load %arg5[%c0_10, %c0_11] : memref<1x256xf32, #tpu.memory_space<vmem>>, vector<1x256xf32>
    %12 = vector.broadcast %11 : vector<1x256xf32> to vector<8x256xf32>
    %13 = arith.addf %10, %12 : vector<8x256xf32>
    %14 = vector.extract_strided_slice %13 {offsets = [0, 0], sizes = [8, 128], strides = [1, 1]} : vector<8x256xf32> to vector<8x128xf32>
    %c0_12 = arith.constant 0 : index
    %c0_13 = arith.constant 0 : index
    %15 = vector.load %arg9[%c0_12, %c0_13] : memref<8x128xf32, #tpu.memory_space<vmem>>, vector<8x128xf32>
    tpu.vector_store %arg9[%c0_12, %c0_13], %14 {strides = array<i32>} : memref<8x128xf32, #tpu.memory_space<vmem>>, vector<8x128xf32>,
    %cst_14 = arith.constant 0.000000e+00 : f32
    %16 = vector.broadcast %cst_14 : f32 to vector<8x256xf32>
    %17 = arith.maximumf %13, %16 : vector<8x256xf32>
    %c0_15 = arith.constant 0 : index
    %c0_16 = arith.constant 0 : index
    %18 = vector.load %arg6[%c0_15, %c0_16] : memref<256x128xf32, #tpu.memory_space<vmem>>, vector<256x128xf32>
    %cst_17 = arith.constant dense<0.000000e+00> : vector<8x128xf32>
    %19 = tpu.matmul %17, %18, %cst_17 {dimension_numbers = #tpu.dot_dimension_numbers<[1], [0], [0], [1], [0, 0, 1, 1], [], []>} : vector<8x256xf32>, vector<256x128xf32>, vector<8x128xf32> -> vector<8x128xf32>
    %c0_18 = arith.constant 0 : index
    %c0_19 = arith.constant 0 : index
    %20 = vector.load %arg7[%c0_18, %c0_19] : memref<1x128xf32, #tpu.memory_space<vmem>>, vector<1x128xf32>
    %21 = vector.broadcast %20 : vector<1x128xf32> to vector<8x128xf32>
    %22 = arith.addf %19, %21 : vector<8x128xf32>
    %c0_20 = arith.constant 0 : index
    %c0_21 = arith.constant 0 : index
    %c0_22 = arith.constant 0 : index
    %23 = vector.load %arg8[%c0_20, %c0_21, %c0_22] : memref<1x8x128xf32, #tpu.memory_space<vmem>>, vector<1x8x128xf32>
    %24 = vector.shape_cast %23 : vector<1x8x128xf32> to vector<8x128xf32>
    %25 = vector.shape_cast %22 : vector<8x128xf32> to vector<1x8x128xf32>
    tpu.vector_store %arg8[%c0_20, %c0_21, %c0_22], %25 {strides = array<i32>} : memref<1x8x128xf32, #tpu.memory_space<vmem>>, vector<1x8x128xf32>,
    return
  }
  func.func @transform_0(%arg0: i32) -> (i32, i32, i32) {
    %c0_i32 = arith.constant 0 : i32
    %c0_i32_0 = arith.constant 0 : i32
    %c0_i32_1 = arith.constant 0 : i32
    return %arg0, %c0_i32, %c0_i32_0 : i32, i32, i32
  }
  func.func @transform_1(%arg0: i32) -> (i32, i32) {
    %c0_i32 = arith.constant 0 : i32
    %c0_i32_0 = arith.constant 0 : i32
    %c0_i32_1 = arith.constant 0 : i32
    return %c0_i32, %c0_i32_0 : i32, i32
  }
  func.func @transform_2(%arg0: i32) -> (i32, i32) {
    %c0_i32 = arith.constant 0 : i32
    %c0_i32_0 = arith.constant 0 : i32
    %c0_i32_1 = arith.constant 0 : i32
    return %c0_i32, %c0_i32_0 : i32, i32
  }
  func.func @transform_3(%arg0: i32) -> (i32, i32) {
    %c0_i32 = arith.constant 0 : i32
    %c0_i32_0 = arith.constant 0 : i32
    %c0_i32_1 = arith.constant 0 : i32
    return %c0_i32, %c0_i32_0 : i32, i32
  }
  func.func @transform_4(%arg0: i32) -> (i32, i32) {
    %c0_i32 = arith.constant 0 : i32
    %c0_i32_0 = arith.constant 0 : i32
    %c0_i32_1 = arith.constant 0 : i32
    return %c0_i32, %c0_i32_0 : i32, i32
  }
  func.func @transform_5(%arg0: i32) -> (i32, i32) {
    %c0_i32 = arith.constant 0 : i32
    %c0_i32_0 = arith.constant 0 : i32
    %c0_i32_1 = arith.constant 0 : i32
    return %c0_i32, %c0_i32_0 : i32, i32
  }
  func.func @transform_6(%arg0: i32) -> (i32, i32) {
    %c0_i32 = arith.constant 0 : i32
    %c0_i32_0 = arith.constant 0 : i32
    %c0_i32_1 = arith.constant 0 : i32
    return %c0_i32, %c0_i32_0 : i32, i32
  }
  func.func @transform_7(%arg0: i32) -> (i32, i32, i32) {
    %c0_i32 = arith.constant 0 : i32
    %c0_i32_0 = arith.constant 0 : i32
    %c0_i32_1 = arith.constant 0 : i32
    return %arg0, %c0_i32, %c0_i32_0 : i32, i32, i32
  }
  func.func @transform_8(%arg0: i32) -> (i32, i32) {
    %c0_i32 = arith.constant 0 : i32
    %c0_i32_0 = arith.constant 0 : i32
    %c0_i32_1 = arith.constant 0 : i32
    return %c0_i32, %c0_i32_0 : i32, i32
  }
}

</mosaic_0001>

<llo_original>
// kernel: rnn_forward.1
$region0: #{rnn_forward.1}
  #allocation0 [shape = 'u32[]', space=smem, size = 0x4, offset = 0x4, fixed_abs, tag = 'smem constant byte address 0x4 - core index']
  #allocation1 [shape = 'u32[144,128]{1,0:T(1,128)}', space=vmem, size = 0x12000, scoped, tag = 'internal scratch']
  %s0 = inlined_call_operand.vmem [shape: f32[16,8,16], index: 0, kind: input, shape index: {}]
  %s1 = inlined_call_operand.vmem [shape: f32[8,128], index: 1, kind: input, shape index: {}, may-alias: {1,8}]
  %s2 = inlined_call_operand.vmem [shape: f32[16,256], index: 2, kind: input, shape index: {}]
  %s3 = inlined_call_operand.vmem [shape: f32[128,256], index: 3, kind: input, shape index: {}]
  %s4 = inlined_call_operand.vmem [shape: f32[1,256], index: 4, kind: input, shape index: {}]
  %s5 = inlined_call_operand.vmem [shape: f32[256,128], index: 5, kind: input, shape index: {}]
  %s6 = inlined_call_operand.vmem [shape: f32[1,128], index: 6, kind: input, shape index: {}]
  %s7 = inlined_call_operand.vmem [shape: f32[16,8,128], index: 7, kind: output, shape index: {0}]
  %s8 = inlined_call_operand.vmem [shape: f32[8,128], index: 8, kind: output, shape index: {1}, may-alias: {1,8}]
  %9 = xla_tuple %s7, %s8
  %s10 = sld [smem:[#allocation0]]
  $region73: #{rnn_forward.1} parent=0
    _
  %s12 = ssub.s32 1, %s10
  %s13 = scalar_select 0, %s12, %s10
  loop: start=0, step=1, limit=18
  $region2: #{rnn_forward.1} parent=0 // loop_pre_header
    _
  $region3: #{rnn_forward.1} parent=0 // loop_header
    %s15 = sphi 0, %s19
    %p16 = scmp.ge.s32.totalorder %s15, 18
    %s25 = sphi 0, %s27
    %s28 = sphi 0, %s25
    %s29 = sphi 0, %s28
    %s45 = sphi 0, %s29
    %s49 = sphi 0, %s49
    %s51 = sphi 0, %s49
    %s52 = sphi 0, %s51
    %s66 = sphi 0, %s52
    %s70 = sphi 0, %s70
    %s72 = sphi 0, %s70
    %s73 = sphi 0, %s72
    %s87 = sphi 0, %s73
    %s91 = sphi 0, %s91
    %s93 = sphi 0, %s91
    %s94 = sphi 0, %s93
    %s108 = sphi 0, %s94
    %s112 = sphi 0, %s112
    %s114 = sphi 0, %s112
    %s115 = sphi 0, %s114
    %s129 = sphi 0, %s115
    %s133 = sphi 0, %s133
    %s135 = sphi 0, %s133
    %s136 = sphi 0, %s135
    %s150 = sphi 0, %s136
    %s154 = sphi 0, %s154
    %s156 = sphi 0, %s154
    %s157 = sphi 0, %s156
    %s171 = sphi 0, %s157
    %s177 = sphi 0, %s179
    %s180 = sphi 0, %s177
    %s181 = sphi 0, %s180
    %s197 = sphi 0, %s181
    %s201 = sphi 0, %s201
    %s203 = sphi 0, %s201
    %s204 = sphi 0, %s203
    %s218 = sphi 0, %s204
  $region4: #{rnn_forward.1} parent=0 // loop_header_branch
    %18 = sbr.rel (%p16) target = $region8
  $region5: #{rnn_forward.1} parent=0 // loop_body
    %s20 = ssub.s32 %s15, 1
    %s21 = ssub.s32 %s15, 2
    %s22 = sadd.s32 %s15, 1
    %s23 = ssub.s32 %s15, %s22
    %p24 = scmp.eq.s32.totalorder %s23, 0
    %s26 = sadd.s32 %s25, 1
    %s27 = scalar_select %p24, %s25, %s26
    %p30 = pneg %p24
    %p31 = scmp.eq.s32.totalorder %s15, 15
    %p32 = por %p30, %p31
    %p33 = scmp.ne.s32.totalorder %s25, %s28
    %p34 = scmp.eq.s32.totalorder %s15, 0
    %p35 = por %p33, %p34
    %p36 = scmp.ne.s32.totalorder %s25, %s28
    %p37 = scmp.eq.s32.totalorder %s20, 15
    %p38 = por %p36, %p37
    %p39 = scmp.ne.s32.totalorder %s28, %s29
    %p40 = scmp.eq.s32.totalorder %s20, 0
    %p41 = por %p39, %p40
    %p42 = scmp.ne.s32.totalorder %s28, %s29
    %p43 = scmp.eq.s32.totalorder %s21, 15
    %p44 = por %p42, %p43
    %p46 = scmp.ne.s32.totalorder %s29, %s45
    %p47 = scmp.eq.s32.totalorder %s21, 0
    %p48 = por %p46, %p47
    %s50 = sadd.s32 %s49, 1
    %p53 = scmp.eq.s32.totalorder %s15, 15
    %p54 = scmp.ne.s32.totalorder %s49, %s51
    %p55 = scmp.eq.s32.totalorder %s15, 0
    %p56 = por %p54, %p55
    %p57 = scmp.ne.s32.totalorder %s49, %s51
    %p58 = scmp.eq.s32.totalorder %s20, 15
    %p59 = por %p57, %p58
    %p60 = scmp.ne.s32.totalorder %s51, %s52
    %p61 = scmp.eq.s32.totalorder %s20, 0
    %p62 = por %p60, %p61
    %p63 = scmp.ne.s32.totalorder %s51, %s52
    %p64 = scmp.eq.s32.totalorder %s21, 15
    %p65 = por %p63, %p64
    %p67 = scmp.ne.s32.totalorder %s52, %s66
    %p68 = scmp.eq.s32.totalorder %s21, 0
    %p69 = por %p67, %p68
    %s71 = sadd.s32 %s70, 1
    %p74 = scmp.eq.s32.totalorder %s15, 15
    %p75 = scmp.ne.s32.totalorder %s70, %s72
    %p76 = scmp.eq.s32.totalorder %s15, 0
    %p77 = por %p75, %p76
    %p78 = scmp.ne.s32.totalorder %s70, %s72
    %p79 = scmp.eq.s32.totalorder %s20, 15
    %p80 = por %p78, %p79
    %p81 = scmp.ne.s32.totalorder %s72, %s73
    %p82 = scmp.eq.s32.totalorder %s20, 0
    %p83 = por %p81, %p82
    %p84 = scmp.ne.s32.totalorder %s72, %s73
    %p85 = scmp.eq.s32.totalorder %s21, 15
    %p86 = por %p84, %p85
    %p88 = scmp.ne.s32.totalorder %s73, %s87
    %p89 = scmp.eq.s32.totalorder %s21, 0
    %p90 = por %p88, %p89
    %s92 = sadd.s32 %s91, 1
    %p95 = scmp.eq.s32.totalorder %s15, 15
    %p96 = scmp.ne.s32.totalorder %s91, %s93
    %p97 = scmp.eq.s32.totalorder %s15, 0
    %p98 = por %p96, %p97
    %p99 = scmp.ne.s32.totalorder %s91, %s93
    %p100 = scmp.eq.s32.totalorder %s20, 15
    %p101 = por %p99, %p100
    %p102 = scmp.ne.s32.totalorder %s93, %s94
    %p103 = scmp.eq.s32.totalorder %s20, 0
    %p104 = por %p102, %p103
    %p105 = scmp.ne.s32.totalorder %s93, %s94
    %p106 = scmp.eq.s32.totalorder %s21, 15
    %p107 = por %p105, %p106
    %p109 = scmp.ne.s32.totalorder %s94, %s108
    %p110 = scmp.eq.s32.totalorder %s21, 0
    %p111 = por %p109, %p110
    %s113 = sadd.s32 %s112, 1
    %p116 = scmp.eq.s32.totalorder %s15, 15
    %p117 = scmp.ne.s32.totalorder %s112, %s114
    %p118 = scmp.eq.s32.totalorder %s15, 0
    %p119 = por %p117, %p118
    %p120 = scmp.ne.s32.totalorder %s112, %s114
    %p121 = scmp.eq.s32.totalorder %s20, 15
    %p122 = por %p120, %p121
    %p123 = scmp.ne.s32.totalorder %s114, %s115
    %p124 = scmp.eq.s32.totalorder %s20, 0
    %p125 = por %p123, %p124
    %p126 = scmp.ne.s32.totalorder %s114, %s115
    %p127 = scmp.eq.s32.totalorder %s21, 15
    %p128 = por %p126, %p127
    %p130 = scmp.ne.s32.totalorder %s115, %s129
    %p131 = scmp.eq.s32.totalorder %s21, 0
    %p132 = por %p130, %p131
    %s134 = sadd.s32 %s133, 1
    %p137 = scmp.eq.s32.totalorder %s15, 15
    %p138 = scmp.ne.s32.totalorder %s133, %s135
    %p139 = scmp.eq.s32.totalorder %s15, 0
    %p140 = por %p138, %p139
    %p141 = scmp.ne.s32.totalorder %s133, %s135
    %p142 = scmp.eq.s32.totalorder %s20, 15
    %p143 = por %p141, %p142
    %p144 = scmp.ne.s32.totalorder %s135, %s136
    %p145 = scmp.eq.s32.totalorder %s20, 0
    %p146 = por %p144, %p145
    %p147 = scmp.ne.s32.totalorder %s135, %s136
    %p148 = scmp.eq.s32.totalorder %s21, 15
    %p149 = por %p147, %p148
    %p151 = scmp.ne.s32.totalorder %s136, %s150
    %p152 = scmp.eq.s32.totalorder %s21, 0
    %p153 = por %p151, %p152
    %s155 = sadd.s32 %s154, 1
    %p158 = scmp.eq.s32.totalorder %s15, 15
    %p159 = scmp.ne.s32.totalorder %s154, %s156
    %p160 = scmp.eq.s32.totalorder %s15, 0
    %p161 = por %p159, %p160
    %p162 = scmp.ne.s32.totalorder %s154, %s156
    %p163 = scmp.eq.s32.totalorder %s20, 15
    %p164 = por %p162, %p163
    %p165 = scmp.ne.s32.totalorder %s156, %s157
    %p166 = scmp.eq.s32.totalorder %s20, 0
    %p167 = por %p165, %p166
    %p168 = scmp.ne.s32.totalorder %s156, %s157
    %p169 = scmp.eq.s32.totalorder %s21, 15
    %p170 = por %p168, %p169
    %p172 = scmp.ne.s32.totalorder %s157, %s171
    %p173 = scmp.eq.s32.totalorder %s21, 0
    %p174 = por %p172, %p173
    %s175 = ssub.s32 %s15, %s22
    %p176 = scmp.eq.s32.totalorder %s175, 0
    %s178 = sadd.s32 %s177, 1
    %s179 = scalar_select %p176, %s177, %s178
    %p182 = pneg %p176
    %p183 = scmp.eq.s32.totalorder %s15, 15
    %p184 = por %p182, %p183
    %p185 = scmp.ne.s32.totalorder %s177, %s180
    %p186 = scmp.eq.s32.totalorder %s15, 0
    %p187 = por %p185, %p186
    %p188 = scmp.ne.s32.totalorder %s177, %s180
    %p189 = scmp.eq.s32.totalorder %s20, 15
    %p190 = por %p188, %p189
    %p191 = scmp.ne.s32.totalorder %s180, %s181
    %p192 = scmp.eq.s32.totalorder %s20, 0
    %p193 = por %p191, %p192
    %p194 = scmp.ne.s32.totalorder %s180, %s181
    %p195 = scmp.eq.s32.totalorder %s21, 15
    %p196 = por %p194, %p195
    %p198 = scmp.ne.s32.totalorder %s181, %s197
    %p199 = scmp.eq.s32.totalorder %s21, 0
    %p200 = por %p198, %p199
    %s202 = sadd.s32 %s201, 1
    %p205 = scmp.eq.s32.totalorder %s15, 15
    %p206 = scmp.ne.s32.totalorder %s201, %s203
    %p207 = scmp.eq.s32.totalorder %s15, 0
    %p208 = por %p206, %p207
    %p209 = scmp.ne.s32.totalorder %s201, %s203
    %p210 = scmp.eq.s32.totalorder %s20, 15
    %p211 = por %p209, %p210
    %p212 = scmp.ne.s32.totalorder %s203, %s204
    %p213 = scmp.eq.s32.totalorder %s20, 0
    %p214 = por %p212, %p213
    %p215 = scmp.ne.s32.totalorder %s203, %s204
    %p216 = scmp.eq.s32.totalorder %s21, 15
    %p217 = por %p215, %p216
    %p219 = scmp.ne.s32.totalorder %s204, %s218
    %p220 = scmp.eq.s32.totalorder %s21, 0
    %p221 = por %p219, %p220
    %p222 = scmp.le.s32.totalorder 1, %s15
    %p223 = scmp.lt.s32.totalorder %s15, 17
    %p224 = pnand %p222, %p223
    %p225 = pneg %p224
    // Predicated region
    $region9: #{rnn_forward.1} parent=5 // pred_check
      _
    $region10: #{rnn_forward.1} parent=5 // pred_check_branch
      %227 = sbr.rel (%p224) target = $region12
    $region11: #{rnn_forward.1} parent=5 // pred_region
      %s228 = ssub.s32 %s15, 1
      // Predicated region
      $region13: #{rnn_forward.1} parent=11 // pred_check
        %p229 = pneg %p62
      $region14: #{rnn_forward.1} parent=11 // pred_check_branch
        %231 = sbr.rel (%p229) target = $region16
      $region15: #{rnn_forward.1} parent=11 // pred_region
        _
      $region16: #{rnn_forward.1} parent=11 // pred_fallthru
        _
      // Predicated region
      $region17: #{rnn_forward.1} parent=11 // pred_check
        %p232 = pneg %p83
      $region18: #{rnn_forward.1} parent=11 // pred_check_branch
        %234 = sbr.rel (%p232) target = $region20
      $region19: #{rnn_forward.1} parent=11 // pred_region
        _
      $region20: #{rnn_forward.1} parent=11 // pred_fallthru
        _
      // Predicated region
      $region21: #{rnn_forward.1} parent=11 // pred_check
        %p235 = pneg %p104
      $region22: #{rnn_forward.1} parent=11 // pred_check_branch
        %237 = sbr.rel (%p235) target = $region24
      $region23: #{rnn_forward.1} parent=11 // pred_region
        _
      $region24: #{rnn_forward.1} parent=11 // pred_fallthru
        _
      // Predicated region
      $region25: #{rnn_forward.1} parent=11 // pred_check
        %p238 = pneg %p125
      $region26: #{rnn_forward.1} parent=11 // pred_check_branch
        %240 = sbr.rel (%p238) target = $region28
      $region27: #{rnn_forward.1} parent=11 // pred_region
        _
      $region28: #{rnn_forward.1} parent=11 // pred_fallthru
        _
      // Predicated region
      $region29: #{rnn_forward.1} parent=11 // pred_check
        %p241 = pneg %p146
      $region30: #{rnn_forward.1} parent=11 // pred_check_branch
        %243 = sbr.rel (%p241) target = $region32
      $region31: #{rnn_forward.1} parent=11 // pred_region
        _
      $region32: #{rnn_forward.1} parent=11 // pred_fallthru
        _
      // Predicated region
      $region33: #{rnn_forward.1} parent=11 // pred_check
        %p244 = pneg %p167
      $region34: #{rnn_forward.1} parent=11 // pred_check_branch
        %246 = sbr.rel (%p244) target = $region36
      $region35: #{rnn_forward.1} parent=11 // pred_region
        _
      $region36: #{rnn_forward.1} parent=11 // pred_fallthru
        _
    $region12: #{rnn_forward.1} parent=5 // pred_fallthru
      _
    %p247 = scmp.lt.s32.totalorder %s15, 16
    // Predicated region
    $region37: #{rnn_forward.1} parent=5 // pred_check
      %p248 = pneg %p247
    $region38: #{rnn_forward.1} parent=5 // pred_check_branch
      %250 = sbr.rel (%p248) target = $region40
    $region39: #{rnn_forward.1} parent=5 // pred_region
      // Predicated region
      $region41: #{rnn_forward.1} parent=39 // pred_check
        %p251 = pneg %p35
      $region42: #{rnn_forward.1} parent=39 // pred_check_branch
        %253 = sbr.rel (%p251) target = $region44
      $region43: #{rnn_forward.1} parent=39 // pred_region
        %p254 = scmp.lt.s32.totalorder %s15, 15
        %s255 = scalar_select %p254, %s15, 15
        %s256 = smul.addr %s255, 8
        %s257 = scalar_lea.vmem %s0, %s256
      $region44: #{rnn_forward.1} parent=39 // pred_fallthru
        _
    $region40: #{rnn_forward.1} parent=5 // pred_fallthru
      _
    %p258 = scmp.le.s32.totalorder 1, %s15
    %p259 = scmp.lt.s32.totalorder %s15, 17
    %p260 = pnand %p258, %p259
    %p261 = pneg %p260
    // Predicated region
    $region45: #{rnn_forward.1} parent=5 // pred_check
      _
    $region46: #{rnn_forward.1} parent=5 // pred_check_branch
      %263 = sbr.rel (%p260) target = $region48
    $region47: #{rnn_forward.1} parent=5 // pred_region
      %s264 = ssub.s32 %s15, 1
      %p265 = scmp.lt.s32.totalorder %s20, 15
      %s266 = scalar_select %p265, %s20, 15
      %s267 = smul.addr %s266, 8
      %s268 = scalar_lea.vmem %s0, %s267
      %p269 = pneg %p41
      %p270 = pneg %p38
      %p271 = pneg %p62
      %p272 = pneg %p59
      %p273 = pneg %p83
      %p274 = pneg %p80
      %p275 = pneg %p104
      %p276 = pneg %p101
      %p277 = pneg %p125
      %p278 = pneg %p122
      %p279 = pneg %p146
      %p280 = pneg %p143
      %p281 = pneg %p167
      %p282 = pneg %p164
      %p283 = pneg %p193
      %p284 = pneg %p190
      %p285 = scmp.lt.s32.totalorder %s20, 15
      %s286 = scalar_select %p285, %s20, 15
      %s287 = smul.addr %s286, 8
      %s288 = scalar_lea.vmem %s7, %s287
      %p289 = pneg %p214
      %p290 = pneg %p211
      %p291 = scmp.lt.s32.totalorder %s20, 15
      %s292 = scalar_select %p291, %s20, 15
      %s293 = smul.addr %s292, 8
      %s294 = scalar_lea.vmem %s0, %s293
      %p295 = scmp.lt.s32.totalorder %s20, 15
      %s296 = scalar_select %p295, %s20, 15
      %s297 = smul.addr %s296, 8
      %s298 = scalar_lea.vmem %s7, %s297
      %p299 = scmp.eq.s32.totalorder %s20, 0
      // Predicated region
      $region49: #{rnn_forward.1} parent=47 // pred_check
        %p300 = pneg %p299
      $region50: #{rnn_forward.1} parent=47 // pred_check_branch
        %302 = sbr.rel (%p300) target = $region52
      $region51: #{rnn_forward.1} parent=47 // pred_region
        %v303 = vld [vmem:[%s1] sm:$0xff]
        %304 = vst [vmem:[%s8] sm:$0xff] %v303
      $region52: #{rnn_forward.1} parent=47 // pred_fallthru
        _
      %v305 = vld [vmem:[%s294] sm:$0xff]
      %v306 = vld [vmem:[%s8] sm:$0xff]
      %v307 = vld [vmem:[%s2] sm:$0xff]
      %v308 = vld [vmem:[%s2 + $0x8] sm:$0xff]
      %v309 = vld [vmem:[%s2 + $0x10] sm:$0xff]
      %v310 = vld [vmem:[%s2 + $0x18] sm:$0xff]
      %v311 = vld [vmem:[%s3] sm:$0xff]
      %v312 = vld [vmem:[%s3 + $0x8] sm:$0xff]
      %v313 = vld [vmem:[%s3 + $0x10] sm:$0xff]
      %v314 = vld [vmem:[%s3 + $0x18] sm:$0xff]
      %v315 = vld [vmem:[%s3 + $0x20] sm:$0xff]
      %v316 = vld [vmem:[%s3 + $0x28] sm:$0xff]
      %v317 = vld [vmem:[%s3 + $0x30] sm:$0xff]
      %v318 = vld [vmem:[%s3 + $0x38] sm:$0xff]
      %v319 = vld [vmem:[%s3 + $0x40] sm:$0xff]
      %v320 = vld [vmem:[%s3 + $0x48] sm:$0xff]
      %v321 = vld [vmem:[%s3 + $0x50] sm:$0xff]
      %v322 = vld [vmem:[%s3 + $0x58] sm:$0xff]
      %v323 = vld [vmem:[%s3 + $0x60] sm:$0xff]
      %v324 = vld [vmem:[%s3 + $0x68] sm:$0xff]
      %v325 = vld [vmem:[%s3 + $0x70] sm:$0xff]
      %v326 = vld [vmem:[%s3 + $0x78] sm:$0xff]
      %v327 = vld [vmem:[%s3 + $0x80] sm:$0xff]
      %v328 = vld [vmem:[%s3 + $0x88] sm:$0xff]
      %v329 = vld [vmem:[%s3 + $0x90] sm:$0xff]
      %v330 = vld [vmem:[%s3 + $0x98] sm:$0xff]
      %v331 = vld [vmem:[%s3 + $0xa0] sm:$0xff]
      %v332 = vld [vmem:[%s3 + $0xa8] sm:$0xff]
      %v333 = vld [vmem:[%s3 + $0xb0] sm:$0xff]
      %v334 = vld [vmem:[%s3 + $0xb8] sm:$0xff]
      %v335 = vld [vmem:[%s3 + $0xc0] sm:$0xff]
      %v336 = vld [vmem:[%s3 + $0xc8] sm:$0xff]
      %v337 = vld [vmem:[%s3 + $0xd0] sm:$0xff]
      %v338 = vld [vmem:[%s3 + $0xd8] sm:$0xff]
      %v339 = vld [vmem:[%s3 + $0xe0] sm:$0xff]
      %v340 = vld [vmem:[%s3 + $0xe8] sm:$0xff]
      %v341 = vld [vmem:[%s3 + $0xf0] sm:$0xff]
      %v342 = vld [vmem:[%s3 + $0xf8] sm:$0xff]
      %343 = vmatprep.subr.mxu0 %v312
      %344 = vmatpush1.msra.mxu0 %v311
      %345 = vmatprep.subr.mxu0 %v314
      %346 = vmatpush1.msra.mxu0 %v313
      %347 = vmatprep.subr.mxu0 %v316
      %348 = vmatpush1.msra.mxu0 %v315
      %349 = vmatprep.subr.mxu0 %v318
      %350 = vmatpush1.msra.mxu0 %v317
      %351 = vmatprep.subr.mxu0 %v320
      %352 = vmatpush1.msra.mxu0 %v319
      %353 = vmatprep.subr.mxu0 %v322
      %354 = vmatpush1.msra.mxu0 %v321
      %355 = vmatprep.subr.mxu0 %v324
      %356 = vmatpush1.msra.mxu0 %v323
      %357 = vmatprep.subr.mxu0 %v326
      %358 = vmatpush1.msra.mxu0 %v325
      %359 = vmatprep.subr.mxu0 %v328
      %360 = vmatpush1.msra.mxu0 %v327
      %361 = vmatprep.subr.mxu0 %v330
      %362 = vmatpush1.msra.mxu0 %v329
      %363 = vmatprep.subr.mxu0 %v332
      %364 = vmatpush1.msra.mxu0 %v331
      %365 = vmatprep.subr.mxu0 %v334
      %366 = vmatpush1.msra.mxu0 %v333
      %367 = vmatprep.subr.mxu0 %v336
      %368 = vmatpush1.msra.mxu0 %v335
      %369 = vmatprep.subr.mxu0 %v338
      %370 = vmatpush1.msra.mxu0 %v337
      %371 = vmatprep.subr.mxu0 %v340
      %372 = vmatpush1.msra.mxu0 %v339
      %373 = vmatprep.subr.mxu0 %v342
      %374 = vmatpush1.msra.mxu0 %v341
      %375 = vmatprep.subr.mxu0 0.0
      %376 = vmatpush1.msra.mxu0 0.0
      %377 = vmatprep.subr.mxu0 0.0
      %378 = vmatpush1.msra.mxu0 0.0
      %379 = vmatprep.subr.mxu0 0.0
      %380 = vmatpush1.msra.mxu0 0.0
      %381 = vmatprep.subr.mxu0 0.0
      %382 = vmatpush1.msra.mxu0 0.0
      %383 = vmatprep.subr.mxu0 0.0
      %384 = vmatpush1.msra.mxu0 0.0
      %385 = vmatprep.subr.mxu0 0.0
      %386 = vmatpush1.msra.mxu0 0.0
      %387 = vmatprep.subr.mxu0 0.0
      %388 = vmatpush1.msra.mxu0 0.0
      %389 = vmatprep.subr.mxu0 0.0
      %390 = vmatpush1.msra.mxu0 0.0
      %391 = vmatprep.subr.mxu0 0.0
      %392 = vmatpush1.msra.mxu0 0.0
      %393 = vmatprep.subr.mxu0 0.0
      %394 = vmatpush1.msra.mxu0 0.0
      %395 = vmatprep.subr.mxu0 0.0
      %396 = vmatpush1.msra.mxu0 0.0
      %397 = vmatprep.subr.mxu0 0.0
      %398 = vmatpush1.msra.mxu0 0.0
      %399 = vmatprep.subr.mxu0 0.0
      %400 = vmatpush1.msra.mxu0 0.0
      %401 = vmatprep.subr.mxu0 0.0
      %402 = vmatpush1.msra.mxu0 0.0
      %403 = vmatprep.subr.mxu0 0.0
      %404 = vmatpush1.msra.mxu0 0.0
      %405 = vmatprep.subr.mxu0 0.0
      %406 = vmatpush1.msra.mxu0 0.0
      %407 = vmatprep.mubr.f32.mxu0 0.0
      %408 = vmatmul.mubr.f32.gmra.mrb[0].mxu0 %v306
      %v409 = vpop.f32.mrb[0].mxu0
      %v410 = vadd.f32 0.0, %v409
      %v411 = vpop.f32.mrb[0].mxu0
      %v412 = vadd.f32 0.0, %v411
      %413 = vdwg.mxu0
      %vm414 = vcmask 130048
      %v416 = vsel %vm414, %v305, 0
      %418 = vmatprep.subr.mxu0 %v308
      %419 = vmatpush1.msra.mxu0 %v307
      %420 = vmatprep.subr.mxu0 %v310
      %421 = vmatpush1.msra.mxu0 %v309
      %422 = vmatprep.subr.mxu0 0.0
      %423 = vmatpush1.msra.mxu0 0.0
      %424 = vmatprep.subr.mxu0 0.0
      %425 = vmatpush1.msra.mxu0 0.0
      %426 = vmatprep.subr.mxu0 0.0
      %427 = vmatpush1.msra.mxu0 0.0
      %428 = vmatprep.subr.mxu0 0.0
      %429 = vmatpush1.msra.mxu0 0.0
      %430 = vmatprep.subr.mxu0 0.0
      %431 = vmatpush1.msra.mxu0 0.0
      %432 = vmatprep.subr.mxu0 0.0
      %433 = vmatpush1.msra.mxu0 0.0
      %434 = vmatprep.subr.mxu0 0.0
      %435 = vmatpush1.msra.mxu0 0.0
      %436 = vmatprep.subr.mxu0 0.0
      %437 = vmatpush1.msra.mxu0 0.0
      %438 = vmatprep.subr.mxu0 0.0
      %439 = vmatpush1.msra.mxu0 0.0
      %440 = vmatprep.subr.mxu0 0.0
      %441 = vmatpush1.msra.mxu0 0.0
      %442 = vmatprep.subr.mxu0 0.0
      %443 = vmatpush1.msra.mxu0 0.0
      %444 = vmatprep.subr.mxu0 0.0
      %445 = vmatpush1.msra.mxu0 0.0
      %446 = vmatprep.subr.mxu0 0.0
      %447 = vmatpush1.msra.mxu0 0.0
      %448 = vmatprep.subr.mxu0 0.0
      %449 = vmatpush1.msra.mxu0 0.0
      %450 = vmatprep.subr.mxu0 0.0
      %451 = vmatpush1.msra.mxu0 0.0
      %452 = vmatprep.subr.mxu0 0.0
      %453 = vmatpush1.msra.mxu0 0.0
      %454 = vmatprep.subr.mxu0 0.0
      %455 = vmatpush1.msra.mxu0 0.0
      %456 = vmatprep.subr.mxu0 0.0
      %457 = vmatpush1.msra.mxu0 0.0
      %458 = vmatprep.subr.mxu0 0.0
      %459 = vmatpush1.msra.mxu0 0.0
      %460 = vmatprep.subr.mxu0 0.0
      %461 = vmatpush1.msra.mxu0 0.0
      %462 = vmatprep.subr.mxu0 0.0
      %463 = vmatpush1.msra.mxu0 0.0
      %464 = vmatprep.subr.mxu0 0.0
      %465 = vmatpush1.msra.mxu0 0.0
      %466 = vmatprep.subr.mxu0 0.0
      %467 = vmatpush1.msra.mxu0 0.0
      %468 = vmatprep.subr.mxu0 0.0
      %469 = vmatpush1.msra.mxu0 0.0
      %470 = vmatprep.subr.mxu0 0.0
      %471 = vmatpush1.msra.mxu0 0.0
      %472 = vmatprep.subr.mxu0 0.0
      %473 = vmatpush1.msra.mxu0 0.0
      %474 = vmatprep.subr.mxu0 0.0
      %475 = vmatpush1.msra.mxu0 0.0
      %476 = vmatprep.subr.mxu0 0.0
      %477 = vmatpush1.msra.mxu0 0.0
      %478 = vmatprep.subr.mxu0 0.0
      %479 = vmatpush1.msra.mxu0 0.0
      %480 = vmatprep.subr.mxu0 0.0
      %481 = vmatpush1.msra.mxu0 0.0
      %482 = vmatprep.mubr.f32.mxu0 0.0
      %483 = vmatmul.mubr.f32.gmra.mrb[0].mxu0 %v416
      %v484 = vpop.f32.mrb[0].mxu0
      %v485 = vadd.f32 %v410, %v484
      %v486 = vpop.f32.mrb[0].mxu0
      %v487 = vadd.f32 %v412, %v486
      %488 = vdwg.mxu0
      %v489 = vld [vmem:[%s4] sm:$0x3]
      %v491 = vlaneseq
      %v492 = vshrl.u32 %v491, 7
      %v493 = vsub.s32 0, %v492
      %v494 = vrot.slane %v489, %v493
      %v495 = vlaneseq
      %v496 = vshrl.u32 %v495, 7
      %v497 = vsub.s32 1, %v496
      %v498 = vrot.slane %v489, %v497
      %v501 = vadd.f32 %v485, %v494
      %v502 = vadd.f32 %v487, %v498
      %503 = vst [vmem:[%s8] sm:$0xff] %v501
      %v504 = vmax.f32 %v501, 0.0
      %v505 = vmax.f32 %v502, 0.0
      %v506 = vld [vmem:[%s5] sm:$0xff]
      %v507 = vld [vmem:[%s5 + $0x8] sm:$0xff]
      %v508 = vld [vmem:[%s5 + $0x10] sm:$0xff]
      %v509 = vld [vmem:[%s5 + $0x18] sm:$0xff]
      %v510 = vld [vmem:[%s5 + $0x20] sm:$0xff]
      %v511 = vld [vmem:[%s5 + $0x28] sm:$0xff]
      %v512 = vld [vmem:[%s5 + $0x30] sm:$0xff]
      %v513 = vld [vmem:[%s5 + $0x38] sm:$0xff]
      %v514 = vld [vmem:[%s5 + $0x40] sm:$0xff]
      %v515 = vld [vmem:[%s5 + $0x48] sm:$0xff]
      %v516 = vld [vmem:[%s5 + $0x50] sm:$0xff]
      %v517 = vld [vmem:[%s5 + $0x58] sm:$0xff]
      %v518 = vld [vmem:[%s5 + $0x60] sm:$0xff]
      %v519 = vld [vmem:[%s5 + $0x68] sm:$0xff]
      %v520 = vld [vmem:[%s5 + $0x70] sm:$0xff]
      %v521 = vld [vmem:[%s5 + $0x78] sm:$0xff]
      %v522 = vld [vmem:[%s5 + $0x80] sm:$0xff]
      %v523 = vld [vmem:[%s5 + $0x88] sm:$0xff]
      %v524 = vld [vmem:[%s5 + $0x90] sm:$0xff]
      %v525 = vld [vmem:[%s5 + $0x98] sm:$0xff]
      %v526 = vld [vmem:[%s5 + $0xa0] sm:$0xff]
      %v527 = vld [vmem:[%s5 + $0xa8] sm:$0xff]
      %v528 = vld [vmem:[%s5 + $0xb0] sm:$0xff]
      %v529 = vld [vmem:[%s5 + $0xb8] sm:$0xff]
      %v530 = vld [vmem:[%s5 + $0xc0] sm:$0xff]
      %v531 = vld [vmem:[%s5 + $0xc8] sm:$0xff]
      %v532 = vld [vmem:[%s5 + $0xd0] sm:$0xff]
      %v533 = vld [vmem:[%s5 + $0xd8] sm:$0xff]
      %v534 = vld [vmem:[%s5 + $0xe0] sm:$0xff]
      %v535 = vld [vmem:[%s5 + $0xe8] sm:$0xff]
      %v536 = vld [vmem:[%s5 + $0xf0] sm:$0xff]
      %v537 = vld [vmem:[%s5 + $0xf8] sm:$0xff]
      %v538 = vld [vmem:[%s6] sm:$0x1]
      %v540 = vlaneseq
      %v541 = vshrl.u32 %v540, 7
      %v542 = vsub.s32 0, %v541
      %v543 = vrot.slane %v538, %v542
      %545 = vmatprep.subr.mxu0 0.0
      %546 = vmatpush1.msra.mxu0 %v506
      %547 = vmatprep.subr.mxu0 0.0
      %548 = vmatpush1.msra.mxu0 %v507
      %549 = vmatprep.subr.mxu0 0.0
      %550 = vmatpush1.msra.mxu0 %v508
      %551 = vmatprep.subr.mxu0 0.0
      %552 = vmatpush1.msra.mxu0 %v509
      %553 = vmatprep.subr.mxu0 0.0
      %554 = vmatpush1.msra.mxu0 %v510
      %555 = vmatprep.subr.mxu0 0.0
      %556 = vmatpush1.msra.mxu0 %v511
      %557 = vmatprep.subr.mxu0 0.0
      %558 = vmatpush1.msra.mxu0 %v512
      %559 = vmatprep.subr.mxu0 0.0
      %560 = vmatpush1.msra.mxu0 %v513
      %561 = vmatprep.subr.mxu0 0.0
      %562 = vmatpush1.msra.mxu0 %v514
      %563 = vmatprep.subr.mxu0 0.0
      %564 = vmatpush1.msra.mxu0 %v515
      %565 = vmatprep.subr.mxu0 0.0
      %566 = vmatpush1.msra.mxu0 %v516
      %567 = vmatprep.subr.mxu0 0.0
      %568 = vmatpush1.msra.mxu0 %v517
      %569 = vmatprep.subr.mxu0 0.0
      %570 = vmatpush1.msra.mxu0 %v518
      %571 = vmatprep.subr.mxu0 0.0
      %572 = vmatpush1.msra.mxu0 %v519
      %573 = vmatprep.subr.mxu0 0.0
      %574 = vmatpush1.msra.mxu0 %v520
      %575 = vmatprep.subr.mxu0 0.0
      %576 = vmatpush1.msra.mxu0 %v521
      %577 = vmatprep.subr.mxu0 0.0
      %578 = vmatpush1.msra.mxu0 %v522
      %579 = vmatprep.subr.mxu0 0.0
      %580 = vmatpush1.msra.mxu0 %v523
      %581 = vmatprep.subr.mxu0 0.0
      %582 = vmatpush1.msra.mxu0 %v524
      %583 = vmatprep.subr.mxu0 0.0
      %584 = vmatpush1.msra.mxu0 %v525
      %585 = vmatprep.subr.mxu0 0.0
      %586 = vmatpush1.msra.mxu0 %v526
      %587 = vmatprep.subr.mxu0 0.0
      %588 = vmatpush1.msra.mxu0 %v527
      %589 = vmatprep.subr.mxu0 0.0
      %590 = vmatpush1.msra.mxu0 %v528
      %591 = vmatprep.subr.mxu0 0.0
      %592 = vmatpush1.msra.mxu0 %v529
      %593 = vmatprep.subr.mxu0 0.0
      %594 = vmatpush1.msra.mxu0 %v530
      %595 = vmatprep.subr.mxu0 0.0
      %596 = vmatpush1.msra.mxu0 %v531
      %597 = vmatprep.subr.mxu0 0.0
      %598 = vmatpush1.msra.mxu0 %v532
      %599 = vmatprep.subr.mxu0 0.0
      %600 = vmatpush1.msra.mxu0 %v533
      %601 = vmatprep.subr.mxu0 0.0
      %602 = vmatpush1.msra.mxu0 %v534
      %603 = vmatprep.subr.mxu0 0.0
      %604 = vmatpush1.msra.mxu0 %v535
      %605 = vmatprep.subr.mxu0 0.0
      %606 = vmatpush1.msra.mxu0 %v536
      %607 = vmatprep.subr.mxu0 0.0
      %608 = vmatpush1.msra.mxu0 %v537
      %609 = vmatprep.mubr.f32.mxu0 %v505
      %610 = vmatmul.mubr.f32.gmra.mrb[0].mxu0 %v504
      %v611 = vpop.f32.mrb[0].mxu0
      %v612 = vadd.f32 %v543, %v611
      %v613 = vpop.f32.mrb[0].mxu0
      %614 = vdwg.mxu0
      %615 = vst [vmem:[%s298] sm:$0xff] %v612
      %p616 = scmp.lt.s32.totalorder %s20, 15
      %s617 = scalar_select %p616, %s20, 15
      %s618 = smul.addr %s617, 8
      %s619 = scalar_lea.vmem %s7, %s618
      // Predicated region
      $region53: #{rnn_forward.1} parent=47 // pred_check
        %p620 = pneg %p190
      $region54: #{rnn_forward.1} parent=47 // pred_check_branch
        %622 = sbr.rel (%p620) target = $region56
      $region55: #{rnn_forward.1} parent=47 // pred_region
        _
      $region56: #{rnn_forward.1} parent=47 // pred_fallthru
        _
      // Predicated region
      $region57: #{rnn_forward.1} parent=47 // pred_check
        %p623 = pneg %p211
      $region58: #{rnn_forward.1} parent=47 // pred_check_branch
        %625 = sbr.rel (%p623) target = $region60
      $region59: #{rnn_forward.1} parent=47 // pred_region
        _
      $region60: #{rnn_forward.1} parent=47 // pred_fallthru
        _
      // Predicated region
      $region61: #{rnn_forward.1} parent=47 // pred_check
        %p626 = pneg %p211
      $region62: #{rnn_forward.1} parent=47 // pred_check_branch
        %628 = sbr.rel (%p626) target = $region64
      $region63: #{rnn_forward.1} parent=47 // pred_region
        _
      $region64: #{rnn_forward.1} parent=47 // pred_fallthru
        _
    $region48: #{rnn_forward.1} parent=5 // pred_fallthru
      _
    %p629 = scmp.le.s32.totalorder 2, %s15
    // Predicated region
    $region65: #{rnn_forward.1} parent=5 // pred_check
      %p630 = pneg %p629
    $region66: #{rnn_forward.1} parent=5 // pred_check_branch
      %632 = sbr.rel (%p630) target = $region68
    $region67: #{rnn_forward.1} parent=5 // pred_region
      %s633 = ssub.s32 %s15, 2
      // Predicated region
      $region69: #{rnn_forward.1} parent=67 // pred_check
        %p634 = pneg %p196
      $region70: #{rnn_forward.1} parent=67 // pred_check_branch
        %636 = sbr.rel (%p634) target = $region72
      $region71: #{rnn_forward.1} parent=67 // pred_region
        %p637 = scmp.lt.s32.totalorder %s21, 15
        %s638 = scalar_select %p637, %s21, 15
        %s639 = smul.addr %s638, 8
        %s640 = scalar_lea.vmem %s7, %s639
      $region72: #{rnn_forward.1} parent=67 // pred_fallthru
        _
    $region68: #{rnn_forward.1} parent=5 // pred_fallthru
      _
  $region6: #{rnn_forward.1} parent=0 // loop_footer
    %s19 = sadd.s32 1, %s15
  $region7: #{rnn_forward.1} parent=0 // loop_footer_branch
    %14 = sbr.rel target = $region3
  $region8: #{rnn_forward.1} parent=0 // loop_exit
    _

</llo_original>
